<compile_context>
chip_gen: v7x
topology: tpu7x:2x2x1
jax: 0.10.0
libtpu: 0.0.40
codegen_flags: <defaults>
</compile_context>

<pallas_src>
import functools

import jax
import jax.numpy as jnp
from jax.experimental import pallas as pl
from jax.experimental.pallas import tpu as pltpu


# ---- default LIParameters (same values as the PyTorch NamedTuple) ----
P = dict(
    tau_syn_inv=1.0 / 0.005,   # 200.0
    tau_mem_inv=1.0 / 0.01,    # 100.0
    v_leak=0.0,
)
DT = 0.001


def _round_up(n, m):
    return ((n + m - 1) // m) * m


def _largest_divisor_leq(n, cap):
    for d in range(min(n, cap), 0, -1):
        if n % d == 0:
            return d
    return 1


# ----------------------------------------------------------------------------
# Single-step kernel (matches LICell.forward exactly: one Euler step, f32).
# ----------------------------------------------------------------------------
def _li_step_kernel(x_ref, wt_ref, v_ref, i_ref, v_out_ref, i_out_ref,
                    *, one_minus_amem, amem, amem_vleak, one_minus_asyn):
    v = v_ref[...]
    i = i_ref[...]

    # Membrane update uses the *old* current i (matches li_step ordering).
    vi = amem * i
    if amem_vleak != 0.0:                      # trace-time constant fold
        vi = vi + amem_vleak
    v_new = one_minus_amem * v + vi

    # Current decay + synaptic input (weights already pre-transposed to (I, H)).
    i_new = one_minus_asyn * i + jnp.dot(
        x_ref[...], wt_ref[...], preferred_element_type=jnp.float32)

    v_out_ref[...] = v_new
    i_out_ref[...] = i_new


# ----------------------------------------------------------------------------
# Sequence kernel: grid = (hidden tiles [parallel], time chunks [arbitrary]).
# Per grid step: ONE chunk matmul + TT pointwise recurrence steps.
# State accumulators live in the v_final / i_final output refs (constant block
# index across the time axis => VMEM-resident; do NOT change their index_map
# or the time axis semantics without re-adding explicit scratch).
# ----------------------------------------------------------------------------
def _li_seq_kernel(x_ref, w_ref, v0_ref, i0_ref,
                   v_seq_ref, v_fin_ref, i_fin_ref,
                   *, one_minus_amem, amem, amem_vleak, one_minus_asyn):
    tc = pl.program_id(1)                      # time-chunk index (arbitrary axis)
    b = v_fin_ref.shape[0]                     # padded batch rows (static)
    tt = x_ref.shape[0] // b                   # steps per chunk (static)

    @pl.when(tc == 0)
    def _init():
        v_fin_ref[...] = v0_ref[...]
        i_fin_ref[...] = i0_ref[...]

    # Hoisted input projection: one MXU matmul for the whole TT-step chunk.
    # x block is bf16 (streamed), W block is bf16 (resident), f32 accumulation.
    s = jnp.dot(x_ref[...], w_ref[...], preferred_element_type=jnp.float32)

    v = v_fin_ref[...]
    i = i_fin_ref[...]
    for t in range(tt):                        # short static unroll (TT small)
        vi = amem * i
        if amem_vleak != 0.0:
            vi = vi + amem_vleak
        v = one_minus_amem * v + vi            # uses OLD i
        v_seq_ref[pl.ds(t * b, b), :] = v      # lane-dense (b,128) f32 store
        i = one_minus_asyn * i + s[t * b:(t + 1) * b, :]

    v_fin_ref[...] = v
    i_fin_ref[...] = i


# ----------------------------------------------------------------------------
# Wrapper "module": weights and layout preprocessing done ONCE at construction.
# ----------------------------------------------------------------------------
class LICellPallas:
    def __init__(self, input_features, output_features, *, key, p=P, dt=DT):
        self.input_features = int(input_features)
        self.output_features = int(output_features)
        self.p = dict(p)
        self.dt = float(dt)

        # torch.nn.Parameter(torch.randn(H, I) / sqrt(I)) analogue.
        self.input_weights = (
            jax.random.normal(key, (output_features, input_features), jnp.float32)
            / jnp.sqrt(float(input_features)))

        # One-time preprocessing (review: never transpose / relayout per call).
        w_t = self.input_weights.T                              # (I, H) f32
        self._w_t = w_t                                         # single-step path
        self._h_pad = _round_up(output_features, 128)           # lane-dense tiles
        self._w_t_pad = jnp.pad(
            w_t, ((0, 0), (0, self._h_pad - output_features))
        ).astype(jnp.bfloat16)                                  # resident bf16 W

        # Folded Euler constants.
        a_mem = self.dt * float(p["tau_mem_inv"])
        a_syn = self.dt * float(p["tau_syn_inv"])
        self._consts = dict(one_minus_amem=1.0 - a_mem, amem=a_mem,
                            amem_vleak=a_mem * float(p["v_leak"]),
                            one_minus_asyn=1.0 - a_syn)

    def initial_state(self, batch_size):
        z = jnp.zeros((batch_size, self.output_features), jnp.float32)
        return (z, z)

    # -------- LICell.forward: exactly one Euler step --------
    def __call__(self, x, state):
        v, i = state
        out_sd = jax.ShapeDtypeStruct(v.shape, jnp.float32)
        kernel = functools.partial(_li_step_kernel, **self._consts)
        vmem = pl.BlockSpec(memory_space=pltpu.MemorySpace.VMEM)
        v_new, i_new = pl.pallas_call(
            kernel,
            out_shape=(out_sd, out_sd),
            in_specs=[vmem, vmem, vmem, vmem],
            out_specs=(vmem, vmem),
            # state-in -> state-out aliasing (safe: whole-array block, state is
            # fully read before being overwritten).
            input_output_aliases={2: 0, 3: 1},
        )(x, self._w_t, v, i)
        return v_new, (v_new, i_new)

    # -------- Fused, chunked time loop in one pallas_call --------
    def run_sequence(self, xs, state, tt=None):
        T, B, I = xs.shape
        assert I == self.input_features
        H, H_pad = self.output_features, self._h_pad
        v0, i0 = state

        B_pad = _round_up(B, 8)
        if tt is None:
            tt = _largest_divisor_leq(T, 64)    # steps per chunk
        assert T % tt == 0

        # Pad batch rows (zero inputs/state) and hidden columns (zero weight
        # columns => identically-zero dynamics); sliced off below.
        if B_pad != B:
            xs = jnp.pad(xs, ((0, 0), (0, B_pad - B), (0, 0)))
            v0 = jnp.pad(v0, ((0, B_pad - B), (0, 0)))
            i0 = jnp.pad(i0, ((0, B_pad - B), (0, 0)))
        if H_pad != H:
            v0 = jnp.pad(v0, ((0, 0), (0, H_pad - H)))
            i0 = jnp.pad(i0, ((0, 0), (0, H_pad - H)))

        # Fold (T, B) into the sublane axis (free reshape) + bf16 stream.
        xs2d = xs.reshape(T * B_pad, I).astype(jnp.bfloat16)

        TH = 128                                # hidden column tile (lane-dense)
        nh = H_pad // TH
        nt = T // tt

        kernel = functools.partial(_li_seq_kernel, **self._consts)

        grid_spec = pltpu.PrefetchScalarGridSpec(
            num_scalar_prefetch=0,
            grid=(nh, nt),                      # (parallel hidden, arbitrary time)
            in_specs=[
                pl.BlockSpec((tt * B_pad, I), lambda h, tc: (tc, 0)),   # x chunk
                pl.BlockSpec((I, TH), lambda h, tc: (0, h)),            # W resident
                pl.BlockSpec((B_pad, TH), lambda h, tc: (0, h)),        # v0
                pl.BlockSpec((B_pad, TH), lambda h, tc: (0, h)),        # i0
            ],
            out_specs=[
                pl.BlockSpec((tt * B_pad, TH), lambda h, tc: (tc, h)),  # v per step
                pl.BlockSpec((B_pad, TH), lambda h, tc: (0, h)),        # v final
                pl.BlockSpec((B_pad, TH), lambda h, tc: (0, h)),        # i final
            ],
        )

        v_seq2d, v_fin, i_fin = pl.pallas_call(
            kernel,
            out_shape=(
                jax.ShapeDtypeStruct((T * B_pad, H_pad), jnp.float32),
                jax.ShapeDtypeStruct((B_pad, H_pad), jnp.float32),
                jax.ShapeDtypeStruct((B_pad, H_pad), jnp.float32),
            ),
            grid_spec=grid_spec,
            compiler_params=pltpu.CompilerParams(
                dimension_semantics=("parallel", "arbitrary"),
                # Plenty for these tiles on all generations; re-derive for big
                # H on v7x (64 MiB physical VMEM).
                vmem_limit_bytes=32 * 1024 * 1024),
        )(xs2d, self._w_t_pad, v0, i0)

        v_seq = v_seq2d.reshape(T, B_pad, H_pad)[:, :B, :H]
        return v_seq, (v_fin[:B, :H], i_fin[:B, :H])


# ----------------------------------------------------------------------------
# Pure-JAX references mirroring the torch module.
# ----------------------------------------------------------------------------
def li_step_ref(x, state, input_weights, dt=DT, p=P):
    v, i = state
    v_new = v + dt * p["tau_mem_inv"] * (p["v_leak"] - v + i)
    i_decayed = i + (-dt * p["tau_syn_inv"]) * i
    i_new = i_decayed + x @ input_weights.T
    return v_new, (v_new, i_new)


def li_sequence_ref(xs, state0, input_weights, dt=DT, p=P,
                    matmul_dtype=jnp.bfloat16):
    """Reference with the sequence kernel's dtype policy: bf16 matmul operands,
    f32 accumulation, f32 state math."""
    w_t = input_weights.T.astype(matmul_dtype)

    def body(carry, x_t):
        v, i = carry
        v_new = v + dt * p["tau_mem_inv"] * (p["v_leak"] - v + i)
        i_new = i + (-dt * p["tau_syn_inv"]) * i + jnp.dot(
            x_t.astype(matmul_dtype), w_t, preferred_element_type=jnp.float32)
        return (v_new, i_new), v_new

    (v_f, i_f), v_seq = jax.lax.scan(body, state0, xs)
    return v_seq, (v_f, i_f)


if __name__ == "__main__":
    batch = 8              # multiple of 8 sublanes (padded otherwise)
    input_features = 16
    output_features = 32   # padded to 128 lanes inside the sequence wrapper
    seq_len = 32

    key = jax.random.PRNGKey(0)
    k_w, k_x, k_v, k_i = jax.random.split(key, 4)

    cell = LICellPallas(input_features, output_features, key=k_w)

    xs = jax.random.normal(k_x, (seq_len, batch, input_features), jnp.float32)
    v0 = jax.random.normal(k_v, (batch, output_features), jnp.float32)
    i0 = jax.random.normal(k_i, (batch, output_features), jnp.float32)
    state0 = (v0, i0)

    # ---- single step (exactly LICell.forward) ----
    out, new_state = cell(xs[0], state0)
    jax.block_until_ready(out)
    jax.block_until_ready(new_state)

    out_ref, state_ref = li_step_ref(xs[0], state0, cell.input_weights)
    assert jnp.allclose(out, out_ref, atol=1e-4, rtol=1e-5), "single-step v mismatch"
    for got, want in zip(new_state, state_ref):
        assert jnp.allclose(got, want, atol=1e-4, rtol=1e-5), "single-step state mismatch"

    # ---- fused, chunked time-loop kernel (4 chunks of 8 steps) ----
    v_seq, final_state = cell.run_sequence(xs, state0, tt=8)
    jax.block_until_ready(v_seq)
    jax.block_until_ready(final_state)

    v_seq_ref, final_state_ref = li_sequence_ref(xs, state0, cell.input_weights)
    assert jnp.allclose(v_seq, v_seq_ref, atol=1e-3, rtol=1e-3), "sequence v mismatch"
    for got, want in zip(final_state, final_state_ref):
        assert jnp.allclose(got, want, atol=1e-3, rtol=1e-3), "sequence state mismatch"

    print("KERNEL_OK")
</pallas_src>

<mosaic_0001>
module attributes {stable_mosaic.version = 11 : i64} {
  func.func @_li_step_kernel(%arg0: memref<8x16xf32, #tpu.memory_space<vmem>>, %arg1: memref<16x32xf32, #tpu.memory_space<vmem>>, %arg2: memref<8x32xf32, #tpu.memory_space<vmem>>, %arg3: memref<8x32xf32, #tpu.memory_space<vmem>>, %arg4: memref<8x32xf32, #tpu.memory_space<vmem>>, %arg5: memref<8x32xf32, #tpu.memory_space<vmem>>) attributes {dimension_semantics = [], scalar_prefetch = 0 : i64, scratch_operands = 0 : i64, tpu.core_type = #tpu.core_type<tc>} {
    %c0 = arith.constant 0 : index
    %c0_0 = arith.constant 0 : index
    %0 = vector.load %arg2[%c0, %c0_0] : memref<8x32xf32, #tpu.memory_space<vmem>>, vector<8x32xf32>
    %c0_1 = arith.constant 0 : index
    %c0_2 = arith.constant 0 : index
    %1 = vector.load %arg3[%c0_1, %c0_2] : memref<8x32xf32, #tpu.memory_space<vmem>>, vector<8x32xf32>
    %cst = arith.constant 1.000000e-01 : f32
    %2 = vector.broadcast %cst : f32 to vector<8x32xf32>
    %3 = arith.mulf %2, %1 : vector<8x32xf32>
    %cst_3 = arith.constant 0.899999976 : f32
    %4 = vector.broadcast %cst_3 : f32 to vector<8x32xf32>
    %5 = arith.mulf %4, %0 : vector<8x32xf32>
    %6 = arith.addf %5, %3 : vector<8x32xf32>
    %cst_4 = arith.constant 8.000000e-01 : f32
    %7 = vector.broadcast %cst_4 : f32 to vector<8x32xf32>
    %8 = arith.mulf %7, %1 : vector<8x32xf32>
    %c0_5 = arith.constant 0 : index
    %c0_6 = arith.constant 0 : index
    %9 = vector.load %arg0[%c0_5, %c0_6] : memref<8x16xf32, #tpu.memory_space<vmem>>, vector<8x16xf32>
    %c0_7 = arith.constant 0 : index
    %c0_8 = arith.constant 0 : index
    %10 = vector.load %arg1[%c0_7, %c0_8] : memref<16x32xf32, #tpu.memory_space<vmem>>, vector<16x32xf32>
    %cst_9 = arith.constant dense<0.000000e+00> : vector<8x32xf32>
    %11 = tpu.matmul %9, %10, %cst_9 {dimension_numbers = #tpu.dot_dimension_numbers<[1], [0], [0], [1], [0, 0, 1, 1], [], []>} : vector<8x16xf32>, vector<16x32xf32>, vector<8x32xf32> -> vector<8x32xf32>
    %12 = arith.addf %8, %11 : vector<8x32xf32>
    %c0_10 = arith.constant 0 : index
    %c0_11 = arith.constant 0 : index
    %13 = vector.load %arg4[%c0_10, %c0_11] : memref<8x32xf32, #tpu.memory_space<vmem>>, vector<8x32xf32>
    tpu.vector_store %arg4[%c0_10, %c0_11], %6 {strides = array<i32>} : memref<8x32xf32, #tpu.memory_space<vmem>>, vector<8x32xf32>,
    %c0_12 = arith.constant 0 : index
    %c0_13 = arith.constant 0 : index
    %14 = vector.load %arg5[%c0_12, %c0_13] : memref<8x32xf32, #tpu.memory_space<vmem>>, vector<8x32xf32>
    tpu.vector_store %arg5[%c0_12, %c0_13], %12 {strides = array<i32>} : memref<8x32xf32, #tpu.memory_space<vmem>>, vector<8x32xf32>,
    return
  }
}

</mosaic_0001>

<llo_original>
// kernel: tpu_custom_call.1
$region0: #{tpu_custom_call.1}
  #allocation0 [shape = 'u32[]', space=smem, size = 0x4, offset = 0x4, fixed_abs, tag = 'smem constant byte address 0x4 - core index']
  #allocation1 [shape = 'u32[144,128]{1,0:T(1,128)}', space=vmem, size = 0x12000, scoped, tag = 'internal scratch']
  %s0 = inlined_call_operand.vmem [shape: f32[8,16], index: 0, kind: input, shape index: {}]
  %s1 = inlined_call_operand.vmem [shape: f32[16,32], index: 1, kind: input, shape index: {}]
  %s2 = inlined_call_operand.hbm [shape: f32[8,32], index: 2, kind: input, shape index: {}, may-alias: {2,4}]
  %s3 = inlined_call_operand.hbm [shape: f32[8,32], index: 3, kind: input, shape index: {}, may-alias: {3,5}]
  %s4 = inlined_call_operand.hbm [shape: f32[8,32], index: 4, kind: output, shape index: {0}, may-alias: {2,4}]
  %s5 = inlined_call_operand.hbm [shape: f32[8,32], index: 5, kind: output, shape index: {1}, may-alias: {3,5}]
  %6 = xla_tuple %s4, %s5
  %s7 = sld [smem:[#allocation0]]
  $region42: #{tpu_custom_call.1} parent=0
    _
  %s9 = ssub.s32 1, %s7
  %s10 = scalar_select 0, %s9, %s7
  $region1: #{tpu_custom_call.1} parent=0
    #allocation2 [shape = 'u8[4096]{0}', space=vmem, size = 0x1000, scoped, tag = 'input window, operand 2, single buffered']
    #allocation3 [shape = 's32[1]{0}', space=sflag, size = 0x4, scoped, tag = 'scoped memory for tpu_custom_call.1']
    #allocation4 [shape = 's32[1]{0}', space=sflag, size = 0x4, scoped, tag = 'scoped memory for tpu_custom_call.1']
    #allocation5 [shape = 'u8[4096]{0}', space=vmem, size = 0x1000, scoped, tag = 'input window, operand 3, single buffered']
    #allocation6 [shape = 's32[1]{0}', space=sflag, size = 0x4, scoped, tag = 'scoped memory for tpu_custom_call.1']
    #allocation7 [shape = 'u8[4096]{0}', space=vmem, size = 0x1000, scoped, tag = 'output window, operand 0, single buffered']
    #allocation8 [shape = 'u8[4096]{0}', space=vmem, size = 0x1000, scoped, tag = 'output window, operand 1, single buffered']
    #allocation9 [shape = 's32[1]{0}', space=sflag, size = 0x4, scoped, tag = 'scoped memory for tpu_custom_call.1']
    %11 = vsyncpa [#allocation3], 0
    %12 = vsyncpa [#allocation6], 0
    %13 = vsyncpa [#allocation4], 0
    %14 = vsyncpa [#allocation9], 0
    // Predicated region
    $region2: #{tpu_custom_call.1} parent=1 // pred_check
      _
    $region3: #{tpu_custom_call.1} parent=1 // pred_check_branch
      %16 = sbr.rel (0) target = $region5
    $region4: #{tpu_custom_call.1} parent=1 // pred_region
      _
    $region5: #{tpu_custom_call.1} parent=1 // pred_fallthru
      _
    // Predicated region
    $region6: #{tpu_custom_call.1} parent=1 // pred_check
      _
    $region7: #{tpu_custom_call.1} parent=1 // pred_check_branch
      %18 = sbr.rel (0) target = $region9
    $region8: #{tpu_custom_call.1} parent=1 // pred_region
      _
    $region9: #{tpu_custom_call.1} parent=1 // pred_fallthru
      _
    // Predicated region
    $region10: #{tpu_custom_call.1} parent=1 // pred_check
      _
    $region11: #{tpu_custom_call.1} parent=1 // pred_check_branch
      %20 = sbr.rel (0) target = $region13
    $region12: #{tpu_custom_call.1} parent=1 // pred_region
      %s22 = ssub.s32 128, 128
      %23 = vsyncadd [#allocation3], %s22
      %s25 = sshll.u32 [#allocation2], 4
      %s26 = int_to_ptr.vmem [resolvable:$true] %s25
      %28 = dma.hbm_to_vmem [thread:$0]  %s2, 128, %s26, [#allocation3]
    $region13: #{tpu_custom_call.1} parent=1 // pred_fallthru
      _
    // Predicated region
    $region14: #{tpu_custom_call.1} parent=1 // pred_check
      _
    $region15: #{tpu_custom_call.1} parent=1 // pred_check_branch
      %30 = sbr.rel (0) target = $region17
    $region16: #{tpu_custom_call.1} parent=1 // pred_region
      %s32 = ssub.s32 128, 128
      %33 = vsyncadd [#allocation6], %s32
      %s35 = sshll.u32 [#allocation5], 4
      %s36 = int_to_ptr.vmem [resolvable:$true] %s35
      %38 = dma.hbm_to_vmem [thread:$0]  %s3, 128, %s36, [#allocation6]
    $region17: #{tpu_custom_call.1} parent=1 // pred_fallthru
      _
    // Predicated region
    $region18: #{tpu_custom_call.1} parent=1 // pred_check
      _
    $region19: #{tpu_custom_call.1} parent=1 // pred_check_branch
      %40 = sbr.rel (0) target = $region21
    $region20: #{tpu_custom_call.1} parent=1 // pred_region
      %41 = dma.done [#allocation3], 128
    $region21: #{tpu_custom_call.1} parent=1 // pred_fallthru
      _
    // Predicated region
    $region22: #{tpu_custom_call.1} parent=1 // pred_check
      _
    $region23: #{tpu_custom_call.1} parent=1 // pred_check_branch
      %43 = sbr.rel (0) target = $region25
    $region24: #{tpu_custom_call.1} parent=1 // pred_region
      %44 = dma.done [#allocation6], 128
    $region25: #{tpu_custom_call.1} parent=1 // pred_fallthru
      _
    %v45 = vld [vmem:[#allocation2] sm:$0xff]
    %v46 = vld [vmem:[#allocation5] sm:$0xff]
    %v47 = vmul.f32 %v46, 0.1
    %v48 = vmul.f32 %v45, 0.9
    %v49 = vadd.f32 %v48, %v47
    %v50 = vmul.f32 %v46, 0.8
    %v51 = vld [vmem:[%s0] sm:$0xff]
    %v52 = vld [vmem:[%s1] sm:$0xff]
    %v53 = vld [vmem:[%s1 + $0x8] sm:$0xff]
    %vm54 = vcmask 130048
    %v56 = vsel %vm54, %v51, 0
    %58 = vmatprep.subr.mxu0 0.0
    %59 = vmatpush1.msra.mxu0 %v52
    %60 = vmatprep.subr.mxu0 0.0
    %61 = vmatpush1.msra.mxu0 %v53
    %62 = vmatprep.subr.mxu0 0.0
    %63 = vmatpush1.msra.mxu0 0.0
    %64 = vmatprep.subr.mxu0 0.0
    %65 = vmatpush1.msra.mxu0 0.0
    %66 = vmatprep.subr.mxu0 0.0
    %67 = vmatpush1.msra.mxu0 0.0
    %68 = vmatprep.subr.mxu0 0.0
    %69 = vmatpush1.msra.mxu0 0.0
    %70 = vmatprep.subr.mxu0 0.0
    %71 = vmatpush1.msra.mxu0 0.0
    %72 = vmatprep.subr.mxu0 0.0
    %73 = vmatpush1.msra.mxu0 0.0
    %74 = vmatprep.subr.mxu0 0.0
    %75 = vmatpush1.msra.mxu0 0.0
    %76 = vmatprep.subr.mxu0 0.0
    %77 = vmatpush1.msra.mxu0 0.0
    %78 = vmatprep.subr.mxu0 0.0
    %79 = vmatpush1.msra.mxu0 0.0
    %80 = vmatprep.subr.mxu0 0.0
    %81 = vmatpush1.msra.mxu0 0.0
    %82 = vmatprep.subr.mxu0 0.0
    %83 = vmatpush1.msra.mxu0 0.0
    %84 = vmatprep.subr.mxu0 0.0
    %85 = vmatpush1.msra.mxu0 0.0
    %86 = vmatprep.subr.mxu0 0.0
    %87 = vmatpush1.msra.mxu0 0.0
    %88 = vmatprep.subr.mxu0 0.0
    %89 = vmatpush1.msra.mxu0 0.0
    %90 = vmatprep.subr.mxu0 0.0
    %91 = vmatpush1.msra.mxu0 0.0
    %92 = vmatprep.subr.mxu0 0.0
    %93 = vmatpush1.msra.mxu0 0.0
    %94 = vmatprep.subr.mxu0 0.0
    %95 = vmatpush1.msra.mxu0 0.0
    %96 = vmatprep.subr.mxu0 0.0
    %97 = vmatpush1.msra.mxu0 0.0
    %98 = vmatprep.subr.mxu0 0.0
    %99 = vmatpush1.msra.mxu0 0.0
    %100 = vmatprep.subr.mxu0 0.0
    %101 = vmatpush1.msra.mxu0 0.0
    %102 = vmatprep.subr.mxu0 0.0
    %103 = vmatpush1.msra.mxu0 0.0
    %104 = vmatprep.subr.mxu0 0.0
    %105 = vmatpush1.msra.mxu0 0.0
    %106 = vmatprep.subr.mxu0 0.0
    %107 = vmatpush1.msra.mxu0 0.0
    %108 = vmatprep.subr.mxu0 0.0
    %109 = vmatpush1.msra.mxu0 0.0
    %110 = vmatprep.subr.mxu0 0.0
    %111 = vmatpush1.msra.mxu0 0.0
    %112 = vmatprep.subr.mxu0 0.0
    %113 = vmatpush1.msra.mxu0 0.0
    %114 = vmatprep.subr.mxu0 0.0
    %115 = vmatpush1.msra.mxu0 0.0
    %116 = vmatprep.subr.mxu0 0.0
    %117 = vmatpush1.msra.mxu0 0.0
    %118 = vmatprep.subr.mxu0 0.0
    %119 = vmatpush1.msra.mxu0 0.0
    %120 = vmatprep.subr.mxu0 0.0
    %121 = vmatpush1.msra.mxu0 0.0
    %122 = vmatprep.mubr.f32.mxu0 0.0
    %123 = vmatmul.mubr.f32.gmra.mrb[0].mxu0 %v56
    %v124 = vpop.f32.mrb[0].mxu0
    %v125 = vadd.f32 0.0, %v124
    %v126 = vpop.f32.mrb[0].mxu0
    %127 = vdwg.mxu0
    %v128 = vadd.f32 %v50, %v125
    %vm129 = vcmask 261120
    %130 = vst.msk [vmem:[#allocation7] sm:$0xff] %vm129, %v49
    %131 = vst.msk [vmem:[#allocation8] sm:$0xff] %vm129, %v128
    // Predicated region
    $region26: #{tpu_custom_call.1} parent=1 // pred_check
      _
    $region27: #{tpu_custom_call.1} parent=1 // pred_check_branch
      %133 = sbr.rel (0) target = $region29
    $region28: #{tpu_custom_call.1} parent=1 // pred_region
      %s135 = ssub.s32 128, 128
      %136 = vsyncadd [#allocation4], %s135
      %s138 = sshll.u32 [#allocation7], 4
      %s139 = int_to_ptr.vmem [resolvable:$true] %s138
      %141 = dma.vmem_to_hbm [thread:$0]  %s139, 128, %s4, [#allocation4]
    $region29: #{tpu_custom_call.1} parent=1 // pred_fallthru
      _
    // Predicated region
    $region30: #{tpu_custom_call.1} parent=1 // pred_check
      _
    $region31: #{tpu_custom_call.1} parent=1 // pred_check_branch
      %143 = sbr.rel (0) target = $region33
    $region32: #{tpu_custom_call.1} parent=1 // pred_region
      %s145 = ssub.s32 128, 128
      %146 = vsyncadd [#allocation9], %s145
      %s148 = sshll.u32 [#allocation8], 4
      %s149 = int_to_ptr.vmem [resolvable:$true] %s148
      %151 = dma.vmem_to_hbm [thread:$0]  %s149, 128, %s5, [#allocation9]
    $region33: #{tpu_custom_call.1} parent=1 // pred_fallthru
      _
    // Predicated region
    $region34: #{tpu_custom_call.1} parent=1 // pred_check
      _
    $region35: #{tpu_custom_call.1} parent=1 // pred_check_branch
      %153 = sbr.rel (0) target = $region37
    $region36: #{tpu_custom_call.1} parent=1 // pred_region
      %154 = dma.done [#allocation4], 128
    $region37: #{tpu_custom_call.1} parent=1 // pred_fallthru
      _
    // Predicated region
    $region38: #{tpu_custom_call.1} parent=1 // pred_check
      _
    $region39: #{tpu_custom_call.1} parent=1 // pred_check_branch
      %156 = sbr.rel (0) target = $region41
    $region40: #{tpu_custom_call.1} parent=1 // pred_region
      %157 = dma.done [#allocation9], 128
    $region41: #{tpu_custom_call.1} parent=1 // pred_fallthru
      _
    %158 = vsyncpa [#allocation3], 1
    %159 = vsyncpa [#allocation6], 1
    %160 = vsyncpa [#allocation4], 1
    %161 = vsyncpa [#allocation9], 1

</llo_original>
